<compile_context>
chip_gen: v7x
topology: tpu7x:2x2x1
jax: 0.10.0
libtpu: 0.0.40
codegen_flags: <defaults>
</compile_context>

<pallas_src>
import functools

import jax
import jax.numpy as jnp
from jax import lax
from jax.experimental import pallas as pl
from jax.experimental.pallas import tpu as pltpu

MARGIN = 1.0
WEIGHT = 1.0


def loss_wrapper_kernel(slab_ref, w_ref, b_ref, out_ref, *, C, H, half):
    # slab_ref: (2C + H, B) f32 -- rows [0:C]   = scores^T  (samples on lanes)
    #                              rows [C:2C]  = onehot^T  (label one-hot)
    #                              rows [2C:]   = features^T
    #           lanes 0..half-1 are samples 0..half-1; lanes half..B-1 are the
    #           flipped partners B-1..half, so pair i = (lane i, lane half+i).
    # w_ref:    (H, 1) f32   loss-prediction Linear weight column
    # b_ref:    (1,)   f32   bias, in SMEM
    # out_ref:  (1, 1) f32   total loss
    B = slab_ref.shape[1]

    slab = slab_ref[...]                                         # one load
    scores_t = slab[0:C, :]                                      # (C, B)
    onehot   = slab[C:2 * C, :]                                  # (C, B)
    feats_t  = slab[2 * C:, :]                                   # (H, B)

    # --- criterion: per-sample cross entropy (reduction='none'), one pass ---
    m = jnp.max(scores_t, axis=0, keepdims=True)                 # (1, B)
    lse = m + jnp.log(jnp.sum(jnp.exp(scores_t - m), axis=0, keepdims=True))
    picked = jnp.sum(scores_t * onehot, axis=0, keepdims=True)
    target_loss = lse - picked                                   # (1, B)

    # --- loss-prediction module: Linear(H,1) as VPU mul + sublane reduce ---
    bias = b_ref[0]
    pred_loss = jnp.sum(feats_t * w_ref[...], axis=0, keepdims=True) + bias  # (1, B)

    # --- LossPredLoss: pairs are lane-aligned (i, half+i) ---
    tgt_diff = target_loss[:, :half] - target_loss[:, half:]     # (1, half)
    inp_diff = pred_loss[:, :half] - pred_loss[:, half:]         # (1, half)
    # one = 2*sign(clamp(t, min=0)) - 1  ==  +1 if t > 0 else -1
    one = jnp.where(tgt_diff > 0, 1.0, -1.0)
    pair_loss = jnp.maximum(MARGIN - one * inp_diff, 0.0)        # (1, half)
    m_module_loss = jnp.sum(pair_loss, keepdims=True) / half     # (1, 1)

    m_backbone_loss = jnp.sum(target_loss, keepdims=True) / B    # (1, 1)

    out_ref[...] = m_backbone_loss + WEIGHT * m_module_loss


def loss_wrapper(scores, labels, features, w, b):
    B, C = scores.shape
    H = features.shape[1]
    assert B % 2 == 0, "the batch size is not even."
    half = B // 2

    # Pair sample i with its flip partner B-1-i using static slices + rev
    # (cheap fused copies; no XLA gather).
    def pair_merge(x):
        return jnp.concatenate([x[:half], lax.rev(x[half:], (0,))], axis=0)

    scores_m = pair_merge(scores).astype(jnp.float32)            # (B, C)
    labels_m = pair_merge(labels)                                # (B,)
    feats_m = pair_merge(features).astype(jnp.float32)           # (B, H)

    onehot = (labels_m[:, None] == jnp.arange(C)[None, :]).astype(jnp.float32)  # (B, C)

    # Single f32 slab, samples on the lane axis: (2C + H, B).
    slab = jnp.concatenate([scores_m, onehot, feats_m], axis=1).T

    w_col = w.reshape(H, 1).astype(jnp.float32)                  # (H, 1)
    b_s = b.reshape(1).astype(jnp.float32)                       # (1,) scalar in SMEM

    kernel = functools.partial(loss_wrapper_kernel, C=C, H=H, half=half)
    vmem = pl.BlockSpec(memory_space=pltpu.MemorySpace.VMEM)
    smem = pl.BlockSpec(memory_space=pltpu.MemorySpace.SMEM)

    out = pl.pallas_call(
        kernel,
        out_shape=jax.ShapeDtypeStruct((1, 1), jnp.float32),
        in_specs=[vmem, vmem, smem],
        out_specs=vmem,
    )(slab, w_col, b_s)
    return out[0, 0]


def reference(scores, labels, features, w, b):
    # pure-JAX reproduction of LossWrapper.forward (method='lloss')
    B = scores.shape[0]
    logp = jax.nn.log_softmax(scores, axis=-1)
    target_loss = -logp[jnp.arange(B), labels]                   # (B,)
    pred_loss = (features @ w).reshape(-1) + b[0]                # (B,)

    inp = (pred_loss - pred_loss[::-1])[: B // 2]
    tgt = (target_loss - target_loss[::-1])[: B // 2]
    one = 2.0 * jnp.sign(jnp.maximum(tgt, 0.0)) - 1.0
    m_module_loss = jnp.sum(jnp.maximum(MARGIN - one * inp, 0.0)) / (B // 2)
    m_backbone_loss = jnp.sum(target_loss) / B
    return m_backbone_loss + WEIGHT * m_module_loss


if __name__ == "__main__":
    B, C, H = 8, 4, 32  # batch must be even for LossPredLoss
    key = jax.random.PRNGKey(0)
    k_s, k_l, k_f, k_w, k_b = jax.random.split(key, 5)

    scores = jax.random.normal(k_s, (B, C), dtype=jnp.float32)
    labels = jax.random.randint(k_l, (B,), 0, C, dtype=jnp.int32)
    features = jax.random.normal(k_f, (B, H), dtype=jnp.float32)
    # deterministic init of the loss-prediction Linear(H, 1)
    w = (jax.random.normal(k_w, (H, 1), dtype=jnp.float32) / jnp.sqrt(H)).astype(jnp.float32)
    b = jnp.zeros((1,), dtype=jnp.float32)

    out = loss_wrapper(scores, labels, features, w, b)
    jax.block_until_ready(out)

    ref = reference(scores, labels, features, w, b)
    assert jnp.allclose(out, ref, rtol=1e-5, atol=1e-5), (out, ref)
    print("KERNEL_OK")
</pallas_src>

<mosaic_0001>
module attributes {stable_mosaic.version = 11 : i64} {
  func.func @loss_wrapper_kernel(%arg0: memref<40x8xf32, #tpu.memory_space<vmem>>, %arg1: memref<32x1xf32, #tpu.memory_space<vmem>>, %arg2: memref<1xf32, #tpu.memory_space<smem>>, %arg3: memref<1x1xf32, #tpu.memory_space<vmem>>) attributes {dimension_semantics = [], scalar_prefetch = 0 : i64, scratch_operands = 0 : i64, tpu.core_type = #tpu.core_type<tc>} {
    %c0 = arith.constant 0 : index
    %c0_0 = arith.constant 0 : index
    %0 = vector.load %arg0[%c0, %c0_0] : memref<40x8xf32, #tpu.memory_space<vmem>>, vector<40x8xf32>
    %1 = vector.extract_strided_slice %0 {offsets = [0, 0], sizes = [4, 8], strides = [1, 1]} : vector<40x8xf32> to vector<4x8xf32>
    %2 = vector.extract_strided_slice %0 {offsets = [4, 0], sizes = [4, 8], strides = [1, 1]} : vector<40x8xf32> to vector<4x8xf32>
    %3 = vector.extract_strided_slice %0 {offsets = [8, 0], sizes = [32, 8], strides = [1, 1]} : vector<40x8xf32> to vector<32x8xf32>
    %cst = arith.constant dense<0xFF800000> : vector<8xf32>
    %4 = vector.multi_reduction <maximumf>, %1, %cst [0] : vector<4x8xf32> to vector<8xf32>
    %5 = vector.shape_cast %4 : vector<8xf32> to vector<1x8xf32>
    %6 = vector.broadcast %5 : vector<1x8xf32> to vector<4x8xf32>
    %7 = arith.subf %1, %6 : vector<4x8xf32>
    %8 = math.exp %7 : vector<4x8xf32>
    %cst_1 = arith.constant dense<0.000000e+00> : vector<8xf32>
    %9 = vector.multi_reduction <add>, %8, %cst_1 [0] : vector<4x8xf32> to vector<8xf32>
    %10 = vector.shape_cast %9 : vector<8xf32> to vector<1x8xf32>
    %11 = math.log %10 : vector<1x8xf32>
    %12 = arith.addf %5, %11 : vector<1x8xf32>
    %13 = arith.mulf %1, %2 : vector<4x8xf32>
    %cst_2 = arith.constant dense<0.000000e+00> : vector<8xf32>
    %14 = vector.multi_reduction <add>, %13, %cst_2 [0] : vector<4x8xf32> to vector<8xf32>
    %15 = vector.shape_cast %14 : vector<8xf32> to vector<1x8xf32>
    %16 = arith.subf %12, %15 : vector<1x8xf32>
    %c0_3 = arith.constant 0 : index
    %17 = memref.load %arg2[%c0_3] : memref<1xf32, #tpu.memory_space<smem>>
    %c0_4 = arith.constant 0 : index
    %c0_5 = arith.constant 0 : index
    %18 = vector.load %arg1[%c0_4, %c0_5] : memref<32x1xf32, #tpu.memory_space<vmem>>, vector<32x1xf32>
    %19 = vector.broadcast %18 : vector<32x1xf32> to vector<32x8xf32>
    %20 = arith.mulf %3, %19 : vector<32x8xf32>
    %cst_6 = arith.constant dense<0.000000e+00> : vector<8xf32>
    %21 = vector.multi_reduction <add>, %20, %cst_6 [0] : vector<32x8xf32> to vector<8xf32>
    %22 = vector.shape_cast %21 : vector<8xf32> to vector<1x8xf32>
    %23 = vector.broadcast %17 : f32 to vector<1x8xf32>
    %24 = arith.addf %22, %23 : vector<1x8xf32>
    %25 = vector.extract_strided_slice %16 {offsets = [0, 0], sizes = [1, 4], strides = [1, 1]} : vector<1x8xf32> to vector<1x4xf32>
    %26 = vector.extract_strided_slice %16 {offsets = [0, 4], sizes = [1, 4], strides = [1, 1]} : vector<1x8xf32> to vector<1x4xf32>
    %27 = arith.subf %25, %26 : vector<1x4xf32>
    %28 = vector.extract_strided_slice %24 {offsets = [0, 0], sizes = [1, 4], strides = [1, 1]} : vector<1x8xf32> to vector<1x4xf32>
    %29 = vector.extract_strided_slice %24 {offsets = [0, 4], sizes = [1, 4], strides = [1, 1]} : vector<1x8xf32> to vector<1x4xf32>
    %30 = arith.subf %28, %29 : vector<1x4xf32>
    %cst_7 = arith.constant 0.000000e+00 : f32
    %31 = vector.broadcast %cst_7 : f32 to vector<1x4xf32>
    %32 = arith.cmpf ogt, %27, %31 : vector<1x4xf32>
    %cst_8 = arith.constant 1.000000e+00 : f32
    %cst_9 = arith.constant -1.000000e+00 : f32
    %33 = vector.broadcast %cst_8 : f32 to vector<1x4xf32>
    %34 = vector.broadcast %cst_9 : f32 to vector<1x4xf32>
    %35 = arith.select %32, %33, %34 : vector<1x4xi1>, vector<1x4xf32>
    %36 = arith.mulf %35, %30 : vector<1x4xf32>
    %cst_10 = arith.constant 1.000000e+00 : f32
    %37 = vector.broadcast %cst_10 : f32 to vector<1x4xf32>
    %38 = arith.subf %37, %36 : vector<1x4xf32>
    %cst_11 = arith.constant 0.000000e+00 : f32
    %39 = vector.broadcast %cst_11 : f32 to vector<1x4xf32>
    %40 = arith.maximumf %38, %39 : vector<1x4xf32>
    %41 = vector.shape_cast %40 : vector<1x4xf32> to vector<1x1x4xf32>
    %cst_12 = arith.constant dense<0.000000e+00> : vector<1xf32>
    %42 = vector.multi_reduction <add>, %41, %cst_12 [1, 2] : vector<1x1x4xf32> to vector<1xf32>
    %43 = vector.shape_cast %42 : vector<1xf32> to vector<1x1x1xf32>
    %44 = vector.extract %43[0, 0, 0] : f32 from vector<1x1x1xf32>
    %45 = vector.broadcast %44 : f32 to vector<1x1xf32>
    %cst_13 = arith.constant 4.000000e+00 : f32
    %46 = vector.broadcast %cst_13 : f32 to vector<1x1xf32>
    %47 = arith.divf %45, %46 : vector<1x1xf32>
    %48 = vector.shape_cast %16 : vector<1x8xf32> to vector<1x1x8xf32>
    %cst_14 = arith.constant dense<0.000000e+00> : vector<1xf32>
    %49 = vector.multi_reduction <add>, %48, %cst_14 [1, 2] : vector<1x1x8xf32> to vector<1xf32>
    %50 = vector.shape_cast %49 : vector<1xf32> to vector<1x1x1xf32>
    %51 = vector.extract %50[0, 0, 0] : f32 from vector<1x1x1xf32>
    %52 = vector.broadcast %51 : f32 to vector<1x1xf32>
    %cst_15 = arith.constant 8.000000e+00 : f32
    %53 = vector.broadcast %cst_15 : f32 to vector<1x1xf32>
    %54 = arith.divf %52, %53 : vector<1x1xf32>
    %cst_16 = arith.constant 1.000000e+00 : f32
    %55 = vector.broadcast %cst_16 : f32 to vector<1x1xf32>
    %56 = arith.mulf %55, %47 : vector<1x1xf32>
    %57 = arith.addf %54, %56 : vector<1x1xf32>
    %c0_17 = arith.constant 0 : index
    %c0_18 = arith.constant 0 : index
    %58 = vector.load %arg3[%c0_17, %c0_18] : memref<1x1xf32, #tpu.memory_space<vmem>>, vector<1x1xf32>
    tpu.vector_store %arg3[%c0_17, %c0_18], %57 {strides = array<i32>} : memref<1x1xf32, #tpu.memory_space<vmem>>, vector<1x1xf32>,
    return
  }
}

</mosaic_0001>

<llo_original>
// kernel: tpu_custom_call.1
$region0: #{tpu_custom_call.1}
  #allocation0 [shape = 'u32[]', space=smem, size = 0x4, offset = 0x4, fixed_abs, tag = 'smem constant byte address 0x4 - core index']
  #allocation1 [shape = 'u32[144,128]{1,0:T(1,128)}', space=vmem, size = 0x12000, scoped, tag = 'internal scratch']
  #allocation2 [shape = 'f32[1]{0:T(128)S(6)}', space=smem, size = 0x200, scoped, tag = 'scoped memory for tpu_custom_call.1']
  %s0 = inlined_call_operand.vmem [shape: f32[40,8], index: 0, kind: input, shape index: {}]
  %s1 = inlined_call_operand.vmem [shape: f32[32,1], index: 1, kind: input, shape index: {}]
  %s2 = inlined_call_operand.<no memory space> [shape: f32[1], index: 2, kind: input, shape index: {}]
  %s3 = inlined_call_operand.hbm [shape: f32[1,1], index: 3, kind: output, shape index: {}]
  %s4 = sld [smem:[#allocation0]]
  $region22: #{tpu_custom_call.1} parent=0
    _
  %s6 = ssub.s32 1, %s4
  %s7 = scalar_select 0, %s6, %s4
  %8 = sst [smem:[#allocation2]] %s2
  $region1: #{tpu_custom_call.1} parent=0
    #allocation3 [shape = 'u8[512]{0}', space=vmem, size = 0x400, scoped, tag = 'output window, operand 0, single buffered']
    #allocation4 [shape = 's32[1]{0}', space=sflag, size = 0x4, scoped, tag = 'scoped memory for tpu_custom_call.1']
    %9 = vsyncpa [#allocation4], 0
    // Predicated region
    $region2: #{tpu_custom_call.1} parent=1 // pred_check
      _
    $region3: #{tpu_custom_call.1} parent=1 // pred_check_branch
      %11 = sbr.rel (0) target = $region5
    $region4: #{tpu_custom_call.1} parent=1 // pred_region
      _
    $region5: #{tpu_custom_call.1} parent=1 // pred_fallthru
      _
    // Predicated region
    $region6: #{tpu_custom_call.1} parent=1 // pred_check
      _
    $region7: #{tpu_custom_call.1} parent=1 // pred_check_branch
      %13 = sbr.rel (0) target = $region9
    $region8: #{tpu_custom_call.1} parent=1 // pred_region
      _
    $region9: #{tpu_custom_call.1} parent=1 // pred_fallthru
      _
    // Predicated region
    $region10: #{tpu_custom_call.1} parent=1 // pred_check
      _
    $region11: #{tpu_custom_call.1} parent=1 // pred_check_branch
      %15 = sbr.rel (0) target = $region13
    $region12: #{tpu_custom_call.1} parent=1 // pred_region
      _
    $region13: #{tpu_custom_call.1} parent=1 // pred_fallthru
      _
    %v16 = vld [vmem:[%s0] sm:$0xff]
    %v17 = vld [vmem:[%s0 + $0x8] sm:$0xff]
    %v18 = vld [vmem:[%s0 + $0x10] sm:$0xff]
    %v19 = vld [vmem:[%s0 + $0x18] sm:$0xff]
    %v20 = vld [vmem:[%s0 + $0x20] sm:$0xff]
    %vm21 = vcmask 60416
    %v22 = vsel %vm21, %v16, -inf
    %v23 = vrot.slane %v22, 4
    %v24 = vmax.f32 %v22, %v23
    %v25 = vrot.slane %v24, 2
    %v26 = vmax.f32 %v24, %v25
    %v27 = vrot.slane %v26, 1
    %v28 = vmax.f32 %v26, %v27
    %v29 = vsub.f32 %v16, %v28
    %v30 = vmul.f32 %v29, 1.442695
    %v31 = vpow.pop %v30
    %v32 = vsel %vm21, %v31, 0.0
    %v33 = vrot.slane %v32, 4
    %v34 = vadd.f32 %v32, %v33
    %v35 = vrot.slane %v34, 2
    %v36 = vadd.f32 %v34, %v35
    %v37 = vrot.slane %v36, 1
    %v38 = vadd.f32 %v36, %v37
    %v39 = vlog2.pop %v38
    %v40 = vmul.f32 %v39, 0.6931472
    %v41 = vadd.f32 %v28, %v40
    %v43 = vrot.slane %v16, 4
    %v45 = vmul.f32 %v16, %v43
    %v46 = vsel %vm21, %v45, 0.0
    %v47 = vrot.slane %v46, 4
    %v48 = vadd.f32 %v46, %v47
    %v49 = vrot.slane %v48, 2
    %v50 = vadd.f32 %v48, %v49
    %v51 = vrot.slane %v50, 1
    %v52 = vadd.f32 %v50, %v51
    %v53 = vsub.f32 %v41, %v52
    %s54 = sld [smem:[#allocation2]]
    %v55 = vld [vmem:[%s1] sm:$0xff]
    %v56 = vld [vmem:[%s1 + $0x8] sm:$0xff]
    %v57 = vld [vmem:[%s1 + $0x10] sm:$0xff]
    %v58 = vld [vmem:[%s1 + $0x18] sm:$0xff]
    %60 = vset.pattern.permute.xlu0 0
    %61 = vperm.xlu0 %60, %v55
    %v62 = vpop.permute.xlu0 %61
    %65 = vset.pattern.permute.xlu0 0
    %66 = vperm.xlu0 %65, %v56
    %v67 = vpop.permute.xlu0 %66
    %70 = vset.pattern.permute.xlu0 0
    %71 = vperm.xlu0 %70, %v57
    %v72 = vpop.permute.xlu0 %71
    %75 = vset.pattern.permute.xlu0 0
    %76 = vperm.xlu0 %75, %v58
    %v77 = vpop.permute.xlu0 %76
    %v79 = vmul.f32 %v17, %v62
    %v80 = vmul.f32 %v18, %v67
    %v81 = vmul.f32 %v19, %v72
    %v82 = vmul.f32 %v20, %v77
    %vm83 = vcmask 64512
    %v84 = vsel %vm83, %v79, 0.0
    %v85 = vsel %vm83, %v80, 0.0
    %v86 = vadd.f32 %v84, %v85
    %v87 = vsel %vm83, %v81, 0.0
    %v88 = vadd.f32 %v86, %v87
    %v89 = vsel %vm83, %v82, 0.0
    %v90 = vadd.f32 %v88, %v89
    %v91 = vrot.slane %v90, 4
    %v92 = vadd.f32 %v90, %v91
    %v93 = vrot.slane %v92, 2
    %v94 = vadd.f32 %v92, %v93
    %v95 = vrot.slane %v94, 1
    %v96 = vadd.f32 %v94, %v95
    %v97 = vstv %s54
    %v98 = vadd.f32 %v96, %v97
    %100 = vrot.lane.b32.xlu0 %v53, 124
    %v101 = vpop.permute.xlu0 %100
    %v103 = vsub.f32 %v53, %v101
    %105 = vrot.lane.b32.xlu0 %v98, 124
    %v106 = vpop.permute.xlu0 %105
    %v108 = vsub.f32 %v98, %v106
    %vm109 = vcmp.gt.f32.partialorder %v103, 0.0
    %v110 = vsel %vm109, 1.0, -1.0
    %v111 = vmul.f32 %v110, %v108
    %v112 = vsub.f32 1.0, %v111
    %v113 = vmax.f32 %v112, 0.0
    %vm114 = vcmask 24576
    %v115 = vsel %vm114, %v113, 0.0
    %116 = vadd.xlane.f32.xlu0 %v115
    %v117 = vpop.xlane.xlu0 %116
    %v118 = vrot.slane %v117, 4
    %v119 = vadd.f32 %v117, %v118
    %v120 = vrot.slane %v119, 2
    %v121 = vadd.f32 %v119, %v120
    %v122 = vrot.slane %v121, 1
    %v123 = vadd.f32 %v121, %v122
    %s124 = vtos %v123
    %v125 = vstv %s124
    %v126 = vrcp.pop 4.0
    %v127 = vmul.f32 %v125, %v126
    %vm128 = vcmask 57344
    %v129 = vsel %vm128, %v53, 0.0
    %130 = vadd.xlane.f32.xlu0 %v129
    %v131 = vpop.xlane.xlu0 %130
    %v132 = vrot.slane %v131, 4
    %v133 = vadd.f32 %v131, %v132
    %v134 = vrot.slane %v133, 2
    %v135 = vadd.f32 %v133, %v134
    %v136 = vrot.slane %v135, 1
    %v137 = vadd.f32 %v135, %v136
    %s138 = vtos %v137
    %v139 = vstv %s138
    %v140 = vrcp.pop 8.0
    %v141 = vmul.f32 %v139, %v140
    %v142 = vadd.f32 %v141, %v127
    %vm143 = vcmask 0
    %144 = vst.msk [vmem:[#allocation3] sm:$0x1] %vm143, %v142
    // Predicated region
    $region14: #{tpu_custom_call.1} parent=1 // pred_check
      _
    $region15: #{tpu_custom_call.1} parent=1 // pred_check_branch
      %146 = sbr.rel (0) target = $region17
    $region16: #{tpu_custom_call.1} parent=1 // pred_region
      %s148 = ssub.s32 16, 16
      %149 = vsyncadd [#allocation4], %s148
      %s151 = sshll.u32 [#allocation3], 4
      %s152 = int_to_ptr.vmem [resolvable:$true] %s151
      %154 = dma.vmem_to_hbm [thread:$0]  %s152, 16, %s3, [#allocation4]
    $region17: #{tpu_custom_call.1} parent=1 // pred_fallthru
      _
    // Predicated region
    $region18: #{tpu_custom_call.1} parent=1 // pred_check
      _
    $region19: #{tpu_custom_call.1} parent=1 // pred_check_branch
      %156 = sbr.rel (0) target = $region21
    $region20: #{tpu_custom_call.1} parent=1 // pred_region
      %157 = dma.done [#allocation4], 16
    $region21: #{tpu_custom_call.1} parent=1 // pred_fallthru
      _
    %158 = vsyncpa [#allocation4], 1

</llo_original>
